<compile_context>
chip_gen: v7x
topology: tpu7x:2x2x1
jax: 0.10.0
libtpu: 0.0.40
codegen_flags: <defaults>
</compile_context>

<pallas_src>
import jax
import jax.numpy as jnp
from jax.experimental import pallas as pl
from jax.experimental.pallas import tpu as pltpu

SMOOTHING = 0.2
CONFIDENCE = 1.0 - SMOOTHING


def _round_up(x, m):
    return (x + m - 1) // m * m


def _make_kernel(n_total, smoothing):
    confidence = 1.0 - smoothing

    def kernel(lp_ref, tgt_ref, out_ref, acc_ref):
        i = pl.program_id(0)

        @pl.when(i == 0)
        def _():
            acc_ref[...] = jnp.zeros_like(acc_ref)

        # Upcast in-kernel so bf16 inputs only pay bf16 HBM bandwidth.
        lp = lp_ref[...].astype(jnp.float32)      # (TILE_N, C)
        tgt = tgt_ref[...]                        # (TILE_N, 1) int32
        tn, c = lp.shape

        # Fused weighted reduction:
        #   loss_row = confidence * (-lp[target]) + smoothing * (-mean(lp))
        #            = -sum_j w_j * lp_j,  w_j = smoothing/c + confidence*onehot_j
        col = jax.lax.broadcasted_iota(jnp.int32, (tn, c), 1)
        w = jnp.where(col == tgt, confidence + smoothing / c, smoothing / c)

        # Mask padded rows of the ragged last tile (global row index >= N).
        row = jax.lax.broadcasted_iota(jnp.int32, (tn, c), 0) + i * tn
        w = jnp.where(row < n_total, w, 0.0)

        acc_ref[...] += -jnp.sum(w * lp)

        @pl.when(i == pl.num_programs(0) - 1)
        def _():
            out_ref[...] = acc_ref[...] * (1.0 / n_total)

    return kernel


def label_smoothing_loss(logprobs, target, *, smoothing=SMOOTHING, tile_n=None):
    """logprobs: (N, C) float32/bfloat16 log-probs, target: (N,) int -> scalar f32."""
    n, c = logprobs.shape
    itemsize = jnp.dtype(logprobs.dtype).itemsize

    if tile_n is None:
        # Keep one (TILE_N, C) tile <= ~8 MiB; double-buffered that's <= 16 MiB,
        # comfortably inside the scoped VMEM limit on v5e/v6e/v7x.
        max_tile_bytes = 8 * 1024 * 1024
        tile_n = max(8, min(1024, (max_tile_bytes // (c * itemsize)) // 8 * 8))
    tile_n = int(min(tile_n, _round_up(n, 8)))
    tile_n = max(8, (tile_n // 8) * 8)

    n_pad = _round_up(n, tile_n)
    num_tiles = n_pad // tile_n

    lp = logprobs
    tgt = target.reshape(n, 1).astype(jnp.int32)
    if n_pad != n:
        lp = jnp.pad(lp, ((0, n_pad - n), (0, 0)))
        tgt = jnp.pad(tgt, ((0, n_pad - n), (0, 0)))

    kernel = _make_kernel(n, smoothing)

    out = pl.pallas_call(
        kernel,
        out_shape=jax.ShapeDtypeStruct((1, 1), jnp.float32),
        grid_spec=pltpu.PrefetchScalarGridSpec(
            num_scalar_prefetch=0,
            grid=(num_tiles,),
            in_specs=[
                pl.BlockSpec((tile_n, c), lambda i: (i, 0)),
                pl.BlockSpec((tile_n, 1), lambda i: (i, 0)),
            ],
            out_specs=pl.BlockSpec((1, 1), lambda i: (0, 0)),
            scratch_shapes=[pltpu.VMEM((1, 1), jnp.float32)],
        ),
        compiler_params=pltpu.CompilerParams(
            dimension_semantics=("arbitrary",),
            vmem_limit_bytes=32 * 1024 * 1024,
        ),
    )(lp, tgt)
    return out[0, 0]


def _reference(logprobs, target):
    n = logprobs.shape[0]
    nll = -logprobs[jnp.arange(n), target]
    smooth = -jnp.mean(logprobs, axis=-1)
    return jnp.mean(CONFIDENCE * nll + SMOOTHING * smooth)


if __name__ == "__main__":
    key = jax.random.PRNGKey(0)
    k1, k2, k3, k4 = jax.random.split(key, 4)

    # Small case (single tile), f32 input.
    N, C = 8, 32
    logits = jax.random.normal(k1, (N, C), dtype=jnp.float32)
    logprobs = jax.nn.log_softmax(logits, axis=-1)
    target = jax.random.randint(k2, (N,), 0, C, dtype=jnp.int32)
    loss = label_smoothing_loss(logprobs, target)
    jax.block_until_ready(loss)
    ref = _reference(logprobs, target)
    assert jnp.allclose(loss, ref, atol=1e-5, rtol=1e-5), (loss, ref)

    # Multi-tile + ragged last tile + bf16 input path (forced TILE_N=64).
    N2, C2 = 200, 256
    logits2 = jax.random.normal(k3, (N2, C2), dtype=jnp.float32)
    logprobs2 = jax.nn.log_softmax(logits2, axis=-1).astype(jnp.bfloat16)
    target2 = jax.random.randint(k4, (N2,), 0, C2, dtype=jnp.int32)
    loss2 = label_smoothing_loss(logprobs2, target2, tile_n=64)
    jax.block_until_ready(loss2)
    ref2 = _reference(logprobs2.astype(jnp.float32), target2)
    assert jnp.allclose(loss2, ref2, atol=1e-4, rtol=1e-4), (loss2, ref2)

    print("KERNEL_OK")
</pallas_src>

<mosaic_0001>
module attributes {stable_mosaic.version = 11 : i64} {
  func.func @kernel(%arg0: i32, %arg1: memref<8x32xf32, #tpu.memory_space<vmem>>, %arg2: memref<8x1xi32, #tpu.memory_space<vmem>>, %arg3: memref<1x1xf32, #tpu.memory_space<vmem>>, %arg4: memref<1x1xf32, #tpu.memory_space<vmem>>) attributes {dimension_semantics = [#tpu.dimension_semantics<arbitrary>], iteration_bounds = array<i64: 1>, scalar_prefetch = 0 : i64, scratch_operands = 1 : i64, tpu.core_type = #tpu.core_type<tc>, window_params = [{transform_indices = @transform_0, window_bounds = array<i64: 8, 32>}, {transform_indices = @transform_1, window_bounds = array<i64: 8, 1>}, {pipeline_mode = #tpu.pipeline_mode<synchronous>, transform_indices = @transform_2, window_bounds = array<i64: 1, 1>}]} {
    %c0_i32 = arith.constant 0 : i32
    %0 = arith.cmpi eq, %arg0, %c0_i32 : i32
    %1 = arith.extui %0 : i1 to i32
    %c0_i32_0 = arith.constant 0 : i32
    %2 = arith.cmpi ne, %1, %c0_i32_0 : i32
    scf.if %2 {
      %cst_15 = arith.constant 0.000000e+00 : f32
      %32 = vector.broadcast %cst_15 : f32 to vector<1x1xf32>
      %c0_16 = arith.constant 0 : index
      %c0_17 = arith.constant 0 : index
      %33 = vector.load %arg4[%c0_16, %c0_17] : memref<1x1xf32, #tpu.memory_space<vmem>>, vector<1x1xf32>
      tpu.vector_store %arg4[%c0_16, %c0_17], %32 {strides = array<i32>} : memref<1x1xf32, #tpu.memory_space<vmem>>, vector<1x1xf32>,
    } else {
    }
    %c0 = arith.constant 0 : index
    %c0_1 = arith.constant 0 : index
    %3 = vector.load %arg1[%c0, %c0_1] : memref<8x32xf32, #tpu.memory_space<vmem>>, vector<8x32xf32>
    %c0_2 = arith.constant 0 : index
    %c0_3 = arith.constant 0 : index
    %4 = vector.load %arg2[%c0_2, %c0_3] : memref<8x1xi32, #tpu.memory_space<vmem>>, vector<8x1xi32>
    %5 = tpu.iota {dimensions = array<i32: 1>} : vector<8x32xi32>
    %6 = vector.broadcast %4 : vector<8x1xi32> to vector<8x32xi32>
    %7 = arith.cmpi eq, %5, %6 : vector<8x32xi32>
    %cst = arith.constant 0.806249976 : f32
    %cst_4 = arith.constant 6.250000e-03 : f32
    %8 = vector.broadcast %cst : f32 to vector<8x32xf32>
    %9 = vector.broadcast %cst_4 : f32 to vector<8x32xf32>
    %10 = arith.select %7, %8, %9 : vector<8x32xi1>, vector<8x32xf32>
    %11 = tpu.iota {dimensions = array<i32: 0>} : vector<8x32xi32>
    %c8_i32 = arith.constant 8 : i32
    %12 = arith.muli %arg0, %c8_i32 : i32
    %13 = vector.broadcast %12 : i32 to vector<8x32xi32>
    %14 = arith.addi %11, %13 : vector<8x32xi32>
    %c8_i32_5 = arith.constant 8 : i32
    %15 = vector.broadcast %c8_i32_5 : i32 to vector<8x32xi32>
    %16 = arith.cmpi slt, %14, %15 : vector<8x32xi32>
    %cst_6 = arith.constant 0.000000e+00 : f32
    %17 = vector.broadcast %cst_6 : f32 to vector<8x32xf32>
    %18 = arith.select %16, %10, %17 : vector<8x32xi1>, vector<8x32xf32>
    %c0_7 = arith.constant 0 : index
    %c0_8 = arith.constant 0 : index
    %19 = vector.load %arg4[%c0_7, %c0_8] : memref<1x1xf32, #tpu.memory_space<vmem>>, vector<1x1xf32>
    %20 = arith.mulf %18, %3 : vector<8x32xf32>
    %21 = vector.shape_cast %20 : vector<8x32xf32> to vector<1x8x32xf32>
    %cst_9 = arith.constant dense<0.000000e+00> : vector<1xf32>
    %22 = vector.multi_reduction <add>, %21, %cst_9 [1, 2] : vector<1x8x32xf32> to vector<1xf32>
    %23 = vector.shape_cast %22 : vector<1xf32> to vector<1x1x1xf32>
    %24 = vector.extract %23[0, 0, 0] : f32 from vector<1x1x1xf32>
    %cst_10 = arith.constant 0.000000e+00 : f32
    %25 = arith.subf %cst_10, %24 : f32
    %26 = vector.broadcast %25 : f32 to vector<1x1xf32>
    %27 = arith.addf %19, %26 : vector<1x1xf32>
    %c0_11 = arith.constant 0 : index
    %c0_12 = arith.constant 0 : index
    %28 = vector.load %arg4[%c0_11, %c0_12] : memref<1x1xf32, #tpu.memory_space<vmem>>, vector<1x1xf32>
    tpu.vector_store %arg4[%c0_11, %c0_12], %27 {strides = array<i32>} : memref<1x1xf32, #tpu.memory_space<vmem>>, vector<1x1xf32>,
    %c0_i32_13 = arith.constant 0 : i32
    %29 = arith.cmpi eq, %arg0, %c0_i32_13 : i32
    %30 = arith.extui %29 : i1 to i32
    %c0_i32_14 = arith.constant 0 : i32
    %31 = arith.cmpi ne, %30, %c0_i32_14 : i32
    scf.if %31 {
      %c0_15 = arith.constant 0 : index
      %c0_16 = arith.constant 0 : index
      %32 = vector.load %arg4[%c0_15, %c0_16] : memref<1x1xf32, #tpu.memory_space<vmem>>, vector<1x1xf32>
      %cst_17 = arith.constant 1.250000e-01 : f32
      %33 = vector.broadcast %cst_17 : f32 to vector<1x1xf32>
      %34 = arith.mulf %32, %33 : vector<1x1xf32>
      %c0_18 = arith.constant 0 : index
      %c0_19 = arith.constant 0 : index
      %35 = vector.load %arg3[%c0_18, %c0_19] : memref<1x1xf32, #tpu.memory_space<vmem>>, vector<1x1xf32>
      tpu.vector_store %arg3[%c0_18, %c0_19], %34 {strides = array<i32>} : memref<1x1xf32, #tpu.memory_space<vmem>>, vector<1x1xf32>,
    } else {
    }
    return
  }
  func.func @transform_0(%arg0: i32) -> (i32, i32) {
    %c0_i32 = arith.constant 0 : i32
    %c0_i32_0 = arith.constant 0 : i32
    return %arg0, %c0_i32 : i32, i32
  }
  func.func @transform_1(%arg0: i32) -> (i32, i32) {
    %c0_i32 = arith.constant 0 : i32
    %c0_i32_0 = arith.constant 0 : i32
    return %arg0, %c0_i32 : i32, i32
  }
  func.func @transform_2(%arg0: i32) -> (i32, i32) {
    %c0_i32 = arith.constant 0 : i32
    %c0_i32_0 = arith.constant 0 : i32
    %c0_i32_1 = arith.constant 0 : i32
    return %c0_i32, %c0_i32_0 : i32, i32
  }
}

</mosaic_0001>

<llo_original>
// kernel: tpu_custom_call.1
$region0: #{tpu_custom_call.1}
  #allocation0 [shape = 'u32[]', space=smem, size = 0x4, offset = 0x4, fixed_abs, tag = 'smem constant byte address 0x4 - core index']
  #allocation1 [shape = 'u32[144,128]{1,0:T(1,128)}', space=vmem, size = 0x12000, scoped, tag = 'internal scratch']
  #allocation2 [shape = 'f32[1,1]{1,0:T(1,128)}', space=vmem, size = 0x200, scoped, tag = 'scratch operand']
  %s0 = inlined_call_operand.vmem [shape: f32[8,32], index: 0, kind: input, shape index: {}]
  %s1 = inlined_call_operand.vmem [shape: s32[8,1], index: 1, kind: input, shape index: {}]
  %s2 = inlined_call_operand.hbm [shape: f32[1,1], index: 2, kind: output, shape index: {}]
  %s3 = sld [smem:[#allocation0]]
  $region26: #{tpu_custom_call.1} parent=0
    _
  %s5 = ssub.s32 1, %s3
  %s6 = scalar_select 0, %s5, %s3
  $region1: #{tpu_custom_call.1} parent=0
    #allocation3 [shape = 'u8[512]{0}', space=vmem, size = 0x400, scoped, tag = 'output window, operand 0, single buffered']
    #allocation4 [shape = 's32[1]{0}', space=sflag, size = 0x4, scoped, tag = 'scoped memory for tpu_custom_call.1']
    %7 = vsyncpa [#allocation4], 0
    // Predicated region
    $region2: #{tpu_custom_call.1} parent=1 // pred_check
      _
    $region3: #{tpu_custom_call.1} parent=1 // pred_check_branch
      %9 = sbr.rel (0) target = $region5
    $region4: #{tpu_custom_call.1} parent=1 // pred_region
      _
    $region5: #{tpu_custom_call.1} parent=1 // pred_fallthru
      _
    // Predicated region
    $region6: #{tpu_custom_call.1} parent=1 // pred_check
      _
    $region7: #{tpu_custom_call.1} parent=1 // pred_check_branch
      %11 = sbr.rel (0) target = $region9
    $region8: #{tpu_custom_call.1} parent=1 // pred_region
      _
    $region9: #{tpu_custom_call.1} parent=1 // pred_fallthru
      _
    %p12 = scmp.eq.s32.totalorder 0, 0
    // Predicated region
    $region10: #{tpu_custom_call.1} parent=1 // pred_check
      %p13 = pneg %p12
    $region11: #{tpu_custom_call.1} parent=1 // pred_check_branch
      %15 = sbr.rel (%p13) target = $region13
    $region12: #{tpu_custom_call.1} parent=1 // pred_region
      %vm16 = vcmask 0
      %17 = vst.msk [vmem:[#allocation2] sm:$0x1] %vm16, 0.0
    $region13: #{tpu_custom_call.1} parent=1 // pred_fallthru
      _
    %v18 = vld [vmem:[%s0] sm:$0xff]
    %v19 = vld [vmem:[%s1] sm:$0xff]
    %v20 = vlaneseq
    %v21 = vand.u32 %v20, 127
    %22 = vset.pattern.permute.xlu0 0
    %23 = vperm.xlu0 %22, %v19
    %v24 = vpop.permute.xlu0 %23
    %vm25 = vcmp.eq.s32.totalorder %v21, %v24
    %v26 = vsel %vm25, 0.80625, 0.00625
    %v27 = vlaneseq
    %v28 = vshrl.u32 %v27, 7
    %s29 = smul.u32 0, 8
    %v30 = vstv %s29
    %v31 = vadd.s32 %v28, %v30
    %vm32 = vcmp.lt.s32.totalorder %v31, 8
    %v33 = vsel %vm32, %v26, 0.0
    %v34 = vld [vmem:[#allocation2] sm:$0x1]
    %v35 = vmul.f32 %v33, %v18
    %vm36 = vcmask 261120
    %v37 = vsel %vm36, %v35, 0.0
    %38 = vadd.xlane.f32.xlu0 %v37
    %v39 = vpop.xlane.xlu0 %38
    %v40 = vrot.slane %v39, 4
    %v41 = vadd.f32 %v39, %v40
    %v42 = vrot.slane %v41, 2
    %v43 = vadd.f32 %v41, %v42
    %v44 = vrot.slane %v43, 1
    %v45 = vadd.f32 %v43, %v44
    %s46 = vtos %v45
    %s47 = ssub.f32 0.0, %s46
    %v48 = vstv %s47
    %v49 = vadd.f32 %v34, %v48
    %vm50 = vcmask 0
    %51 = vst.msk [vmem:[#allocation2] sm:$0x1] %vm50, %v49
    // Predicated region
    $region14: #{tpu_custom_call.1} parent=1 // pred_check
      %p52 = pneg %p12
    $region15: #{tpu_custom_call.1} parent=1 // pred_check_branch
      %54 = sbr.rel (%p52) target = $region17
    $region16: #{tpu_custom_call.1} parent=1 // pred_region
      %v55 = vld [vmem:[#allocation2] sm:$0x1]
      %v56 = vmul.f32 %v55, 0.125
      %57 = vst.msk [vmem:[#allocation3] sm:$0x1] %vm50, %v56
    $region17: #{tpu_custom_call.1} parent=1 // pred_fallthru
      _
    // Predicated region
    $region18: #{tpu_custom_call.1} parent=1 // pred_check
      _
    $region19: #{tpu_custom_call.1} parent=1 // pred_check_branch
      %59 = sbr.rel (0) target = $region21
    $region20: #{tpu_custom_call.1} parent=1 // pred_region
      %s61 = ssub.s32 16, 16
      %62 = vsyncadd [#allocation4], %s61
      %s64 = sshll.u32 [#allocation3], 4
      %s65 = int_to_ptr.vmem [resolvable:$true] %s64
      %67 = dma.vmem_to_hbm [thread:$0]  %s65, 16, %s2, [#allocation4]
    $region21: #{tpu_custom_call.1} parent=1 // pred_fallthru
      _
    // Predicated region
    $region22: #{tpu_custom_call.1} parent=1 // pred_check
      _
    $region23: #{tpu_custom_call.1} parent=1 // pred_check_branch
      %69 = sbr.rel (0) target = $region25
    $region24: #{tpu_custom_call.1} parent=1 // pred_region
      %70 = dma.done [#allocation4], 16
    $region25: #{tpu_custom_call.1} parent=1 // pred_fallthru
      _
    %71 = vsyncpa [#allocation4], 1

</llo_original>
